<compile_context>
chip_gen: v6e
topology: v6e:2x2x1
jax: 0.10.0
libtpu: 0.0.40
codegen_flags: <defaults>
</compile_context>

<pallas_src>
import functools

import jax
import jax.numpy as jnp
from jax.experimental import pallas as pl
from jax.experimental.pallas import tpu as pltpu


def _round_up(a, m):
    return -(-a // m) * m


@functools.lru_cache(maxsize=None)
def _vmem_budget():
    """(vmem_limit_bytes, live-block budget) derived from this chip's VMEM.

    v5e/v6e have 128 MiB of physical VMEM per core, v7x has 64 MiB.  Sizing
    off the queried capacity (instead of a hard-coded 32 MiB) lets this purely
    HBM-bound stencil run much larger blocks on v5e/v6e while staying inside
    v7x's smaller VMEM.
    """
    try:
        cap = int(pltpu.get_tpu_info().vmem_capacity_bytes)
    except Exception:
        cap = 64 * 1024 * 1024  # conservative default: v7x physical per-core VMEM
    limit = min(cap * 3 // 4, 100 * 1024 * 1024)  # leave compiler-scratch headroom
    budget = limit * 3 // 5                       # budget for the live block footprint
    return int(limit), int(budget)


def _choose_block_batch(nc, h, w, itemsize):
    """How many (n, c) slices to process per grid step.

    Sized against the per-chip VMEM budget, accounting for (8, 128) tile
    padding, double-buffered input/output DMA windows (native dtype), ~3
    difference-slab temporaries in the compute dtype and ~2 f32 slabs for the
    magnitude path.  Also keeps >= ~4 grid steps alive when possible so the
    software pipeline (and both v7x TensorCores, via the "parallel" axis)
    always have work to overlap; this guarantees a grid of >= 2 steps for any
    nc >= 2.
    """
    in_nat = _round_up(h, 8) * _round_up(w, 128) * itemsize
    out_nat = _round_up(h - 2, 8) * _round_up(w - 2, 128) * itemsize
    in_f32 = _round_up(h, 8) * _round_up(w, 128) * 4
    per_slice = 2 * in_nat + 2 * out_nat + 3 * in_nat + 2 * in_f32
    _, budget = _vmem_budget()
    tb_vmem = max(1, budget // per_slice)
    tb = max(1, min(tb_vmem, pl.cdiv(nc, 4)))
    return int(min(tb, nc))


def _fd_kernel_roll(x_ref, o_ref):
    """Central-difference gradient magnitude on a (TB, H, W) tile.

    Lane shifts use pltpu.roll (XLU slot, co-issues with the VPU adds),
    applied *after* the sublane slices / vertical difference so only
    (TB, H-2, W)-sized slabs stay live (instead of two extra full-tile rolled
    copies).  Wrapped-around columns only land in the two lanes removed by the
    final start-aligned truncation.
    """
    _, h, w = x_ref.shape
    # Differences in the input dtype (bf16 VALU on v6e/v7x); upcast to f32 only
    # for the square/sqrt so bf16 inputs keep half the temp footprint.
    # TODO(synk): on v5e (no bf16 VALU) bf16 inputs would prefer an f32 upcast here.
    x = x_ref[...]
    x_mid = x[:, 1:h - 1, :]                                   # rows r+1, full width
    # 2*dW at output (r, c):  x[r+1, c+2] - x[r+1, c]
    g_w = pltpu.roll(x_mid, shift=w - 2, axis=2) - x_mid
    # 2*dH at output (r, c):  x[r+2, c+1] - x[r, c+1]
    g_h = pltpu.roll(x[:, 2:h, :] - x[:, 0:h - 2, :], shift=w - 1, axis=2)
    g_w = g_w.astype(jnp.float32)
    g_h = g_h.astype(jnp.float32)
    mag = 0.5 * jnp.sqrt(g_w * g_w + g_h * g_h)
    o_ref[...] = mag[:, :, :w - 2].astype(o_ref.dtype)


def _fd_kernel_slice(x_ref, o_ref):
    """Fallback body using plain slices (always lowers; identical math).

    Structured so both differences are built from full-width slabs and only two
    lane-offset slices are taken (instead of four lane-misaligned slices each
    materializing a full-tile copy).
    """
    _, h, w = x_ref.shape
    x = x_ref[...]
    x_mid = x[:, 1:h - 1, :]
    g_w = (x_mid[:, :, 2:] - x_mid[:, :, :w - 2]).astype(jnp.float32)
    d_v = x[:, 2:h, :] - x[:, 0:h - 2, :]
    g_h = d_v[:, :, 1:w - 1].astype(jnp.float32)
    o_ref[...] = (0.5 * jnp.sqrt(g_w * g_w + g_h * g_h)).astype(o_ref.dtype)


def _build_call(kernel, nc, h, w, tb, dtype, vmem_limit):
    return pl.pallas_call(
        kernel,
        out_shape=jax.ShapeDtypeStruct((nc, h - 2, w - 2), dtype),
        grid=(pl.cdiv(nc, tb),),
        # Blocks span the full (H, W) / (H-2, W-2) extents, so only the trailing
        # partial lane-tile is masked on store; widening the output to W and
        # re-slicing in the wrapper would add a full extra HBM pass.
        # TODO(synk): for production shapes with W << 128, a lane-dense layout
        # (NC or packed slices on the lane axis) is the next big lever, but it
        # needs a layout change / strided DMA rather than a wrapper transpose
        # (which itself costs an HBM pass on this mem-bound stencil).
        in_specs=[pl.BlockSpec((tb, h, w), lambda i: (i, 0, 0))],
        out_specs=pl.BlockSpec((tb, h - 2, w - 2), lambda i: (i, 0, 0)),
        compiler_params=pltpu.CompilerParams(
            dimension_semantics=("parallel",),
            vmem_limit_bytes=vmem_limit,
        ),
    )


@functools.lru_cache(maxsize=None)
def _get_fd_fn(nc, h, w, dtype_name):
    """One-time (per shape/dtype/device-process) kernel selection; cached.

    The compile probe runs once here, keeping the per-call hot path free of
    host syncs and exception handling.
    """
    dtype = jnp.dtype(dtype_name)
    vmem_limit, _ = _vmem_budget()
    tb = _choose_block_batch(nc, h, w, dtype.itemsize)
    x_spec = jax.ShapeDtypeStruct((nc, h, w), dtype)
    try:
        # Probe: pltpu.roll lowering can be rejected for narrow
        # (non-128-multiple) lane extents on some TPU generations.
        fn = jax.jit(_build_call(_fd_kernel_roll, nc, h, w, tb, dtype, vmem_limit))
        fn.lower(x_spec).compile()
        return fn
    except Exception:
        pass
    # Fallback compiles unguarded so genuine configuration errors (e.g. VMEM
    # over-subscription) surface instead of being silently swallowed.
    return jax.jit(_build_call(_fd_kernel_slice, nc, h, w, tb, dtype, vmem_limit))


def finite_difference(x: jax.Array) -> jax.Array:
    """Central finite difference + gradient magnitude over spatial dims of NCHW."""
    n, c, h, w = x.shape
    nc = n * c
    fn = _get_fd_fn(nc, h, w, jnp.dtype(x.dtype).name)
    out = fn(x.reshape(nc, h, w))
    return out.reshape(n, c, h - 2, w - 2)


def _reference(x: jax.Array) -> jax.Array:
    d_h = 0.5 * (x[:, :, 2:, 1:-1] - x[:, :, :-2, 1:-1])
    d_w = 0.5 * (x[:, :, 1:-1, 2:] - x[:, :, 1:-1, :-2])
    return jnp.sqrt(d_h * d_h + d_w * d_w)


if __name__ == "__main__":
    key = jax.random.PRNGKey(0)
    x = jax.random.normal(key, (2, 4, 16, 16), dtype=jnp.float32)

    out = jax.block_until_ready(finite_difference(x))
    ref = jax.block_until_ready(_reference(x))

    assert out.shape == (2, 4, 14, 14), out.shape
    assert jnp.allclose(out, ref, atol=1e-5, rtol=1e-5), "mismatch vs reference"

    print("KERNEL_OK")
</pallas_src>

<mosaic_0001>
module attributes {stable_mosaic.version = 11 : i64} {
  func.func @_fd_kernel_slice(%arg0: i32, %arg1: memref<2x16x16xf32, #tpu.memory_space<vmem>>, %arg2: memref<2x14x14xf32, #tpu.memory_space<vmem>>) attributes {dimension_semantics = [#tpu.dimension_semantics<parallel>], iteration_bounds = array<i64: 4>, scalar_prefetch = 0 : i64, scratch_operands = 0 : i64, tpu.core_type = #tpu.core_type<tc>, window_params = [{transform_indices = @transform_0, window_bounds = array<i64: 2, 16, 16>}, {transform_indices = @transform_1, window_bounds = array<i64: 2, 14, 14>}]} {
    %c0 = arith.constant 0 : index
    %c0_0 = arith.constant 0 : index
    %c0_1 = arith.constant 0 : index
    %0 = vector.load %arg1[%c0, %c0_0, %c0_1] : memref<2x16x16xf32, #tpu.memory_space<vmem>>, vector<2x16x16xf32>
    %1 = vector.extract_strided_slice %0 {offsets = [0, 1, 0], sizes = [2, 14, 16], strides = [1, 1, 1]} : vector<2x16x16xf32> to vector<2x14x16xf32>
    %2 = vector.extract_strided_slice %1 {offsets = [0, 0, 2], sizes = [2, 14, 14], strides = [1, 1, 1]} : vector<2x14x16xf32> to vector<2x14x14xf32>
    %3 = vector.extract_strided_slice %1 {offsets = [0, 0, 0], sizes = [2, 14, 14], strides = [1, 1, 1]} : vector<2x14x16xf32> to vector<2x14x14xf32>
    %4 = arith.subf %2, %3 : vector<2x14x14xf32>
    %5 = vector.extract_strided_slice %0 {offsets = [0, 2, 0], sizes = [2, 14, 16], strides = [1, 1, 1]} : vector<2x16x16xf32> to vector<2x14x16xf32>
    %6 = vector.extract_strided_slice %0 {offsets = [0, 0, 0], sizes = [2, 14, 16], strides = [1, 1, 1]} : vector<2x16x16xf32> to vector<2x14x16xf32>
    %7 = arith.subf %5, %6 : vector<2x14x16xf32>
    %8 = vector.extract_strided_slice %7 {offsets = [0, 0, 1], sizes = [2, 14, 14], strides = [1, 1, 1]} : vector<2x14x16xf32> to vector<2x14x14xf32>
    %9 = arith.mulf %4, %4 : vector<2x14x14xf32>
    %10 = arith.mulf %8, %8 : vector<2x14x14xf32>
    %11 = arith.addf %9, %10 : vector<2x14x14xf32>
    %12 = math.sqrt %11 : vector<2x14x14xf32>
    %cst = arith.constant 5.000000e-01 : f32
    %13 = vector.broadcast %cst : f32 to vector<2x14x14xf32>
    %14 = arith.mulf %13, %12 : vector<2x14x14xf32>
    %c0_2 = arith.constant 0 : index
    %c0_3 = arith.constant 0 : index
    %c0_4 = arith.constant 0 : index
    %15 = vector.load %arg2[%c0_2, %c0_3, %c0_4] : memref<2x14x14xf32, #tpu.memory_space<vmem>>, vector<2x14x14xf32>
    tpu.vector_store %arg2[%c0_2, %c0_3, %c0_4], %14 {strides = array<i32>} : memref<2x14x14xf32, #tpu.memory_space<vmem>>, vector<2x14x14xf32>,
    return
  }
  func.func @transform_0(%arg0: i32) -> (i32, i32, i32) {
    %c0_i32 = arith.constant 0 : i32
    %c0_i32_0 = arith.constant 0 : i32
    %c0_i32_1 = arith.constant 0 : i32
    return %arg0, %c0_i32, %c0_i32_0 : i32, i32, i32
  }
  func.func @transform_1(%arg0: i32) -> (i32, i32, i32) {
    %c0_i32 = arith.constant 0 : i32
    %c0_i32_0 = arith.constant 0 : i32
    %c0_i32_1 = arith.constant 0 : i32
    return %arg0, %c0_i32, %c0_i32_0 : i32, i32, i32
  }
}

</mosaic_0001>

<llo_original>
// kernel: tpu_custom_call.1
$region0: #{tpu_custom_call.1}
  #allocation0 [shape = 'u32[]', space=smem, size = 0x4, offset = 0x4, fixed_abs, tag = 'smem constant byte address 0x4 - core index']
  #allocation1 [shape = 'u32[144,128]{1,0:T(1,128)}', space=vmem, size = 0x12000, scoped, tag = 'internal scratch']
  %s0 = inlined_call_operand.hbm [shape: f32[8,16,16], index: 0, kind: input, shape index: {}]
  %s1 = inlined_call_operand.vmem [shape: f32[8,14,14], index: 1, kind: output, shape index: {}]
  %s2 = sld [smem:[#allocation0]]
  $region41: #{tpu_custom_call.1} parent=0
    _
  %s4 = ssub.s32 1, %s2
  %s5 = scalar_select 0, %s4, %s2
  $region1: #{tpu_custom_call.1} parent=0
    #allocation2 [shape = 'u8[32768]{0}', space=vmem, size = 0x8000, scoped, tag = 'input window, operand 0']
    #allocation3 [shape = 's32[2]{0}', space=sflag, size = 0x8, scoped, tag = 'scoped memory for tpu_custom_call.1']
    %6 = vsyncpa [#allocation3], 0
    %s7 = scalar_lea.sflag [#allocation3], 1
    %8 = vsyncpa %s7, 0
    loop: start=0, step=1, limit=6
    $region2: #{tpu_custom_call.1} parent=1 // loop_pre_header
      _
    $region3: #{tpu_custom_call.1} parent=1 // loop_header
      %s10 = sphi 0, %s14
      %p11 = scmp.ge.s32.totalorder %s10, 6
      %s20 = sphi 0, %s22
      %s23 = sphi 0, %s20
      %s24 = sphi 0, %s23
      %s40 = sphi 0, %s24
      %s46 = sphi 0, %s48
      %s49 = sphi 0, %s46
      %s50 = sphi 0, %s49
      %s66 = sphi 0, %s50
    $region4: #{tpu_custom_call.1} parent=1 // loop_header_branch
      %13 = sbr.rel (%p11) target = $region8
    $region5: #{tpu_custom_call.1} parent=1 // loop_body
      %s15 = ssub.s32 %s10, 1
      %s16 = ssub.s32 %s10, 2
      %s17 = sadd.s32 %s10, 1
      %s18 = ssub.s32 %s10, %s17
      %p19 = scmp.eq.s32.totalorder %s18, 0
      %s21 = sadd.s32 %s20, 1
      %s22 = scalar_select %p19, %s20, %s21
      %p25 = pneg %p19
      %p26 = scmp.eq.s32.totalorder %s10, 3
      %p27 = por %p25, %p26
      %p28 = scmp.ne.s32.totalorder %s20, %s23
      %p29 = scmp.eq.s32.totalorder %s10, 0
      %p30 = por %p28, %p29
      %p31 = scmp.ne.s32.totalorder %s20, %s23
      %p32 = scmp.eq.s32.totalorder %s15, 3
      %p33 = por %p31, %p32
      %p34 = scmp.ne.s32.totalorder %s23, %s24
      %p35 = scmp.eq.s32.totalorder %s15, 0
      %p36 = por %p34, %p35
      %p37 = scmp.ne.s32.totalorder %s23, %s24
      %p38 = scmp.eq.s32.totalorder %s16, 3
      %p39 = por %p37, %p38
      %p41 = scmp.ne.s32.totalorder %s24, %s40
      %p42 = scmp.eq.s32.totalorder %s16, 0
      %p43 = por %p41, %p42
      %s44 = ssub.s32 %s10, %s17
      %p45 = scmp.eq.s32.totalorder %s44, 0
      %s47 = sadd.s32 %s46, 1
      %s48 = scalar_select %p45, %s46, %s47
      %p51 = pneg %p45
      %p52 = scmp.eq.s32.totalorder %s10, 3
      %p53 = por %p51, %p52
      %p54 = scmp.ne.s32.totalorder %s46, %s49
      %p55 = scmp.eq.s32.totalorder %s10, 0
      %p56 = por %p54, %p55
      %p57 = scmp.ne.s32.totalorder %s46, %s49
      %p58 = scmp.eq.s32.totalorder %s15, 3
      %p59 = por %p57, %p58
      %p60 = scmp.ne.s32.totalorder %s49, %s50
      %p61 = scmp.eq.s32.totalorder %s15, 0
      %p62 = por %p60, %p61
      %p63 = scmp.ne.s32.totalorder %s49, %s50
      %p64 = scmp.eq.s32.totalorder %s16, 3
      %p65 = por %p63, %p64
      %p67 = scmp.ne.s32.totalorder %s50, %s66
      %p68 = scmp.eq.s32.totalorder %s16, 0
      %p69 = por %p67, %p68
      %p70 = scmp.le.s32.totalorder 1, %s10
      %p71 = scmp.lt.s32.totalorder %s10, 5
      %p72 = pnand %p70, %p71
      %p73 = pneg %p72
      // Predicated region
      $region9: #{tpu_custom_call.1} parent=5 // pred_check
        _
      $region10: #{tpu_custom_call.1} parent=5 // pred_check_branch
        %75 = sbr.rel (%p72) target = $region12
      $region11: #{tpu_custom_call.1} parent=5 // pred_region
        %s76 = ssub.s32 %s10, 1
      $region12: #{tpu_custom_call.1} parent=5 // pred_fallthru
        _
      %p77 = scmp.lt.s32.totalorder %s10, 4
      // Predicated region
      $region13: #{tpu_custom_call.1} parent=5 // pred_check
        %p78 = pneg %p77
      $region14: #{tpu_custom_call.1} parent=5 // pred_check_branch
        %80 = sbr.rel (%p78) target = $region16
      $region15: #{tpu_custom_call.1} parent=5 // pred_region
        // Predicated region
        $region17: #{tpu_custom_call.1} parent=15 // pred_check
          %p81 = pneg %p30
        $region18: #{tpu_custom_call.1} parent=15 // pred_check_branch
          %83 = sbr.rel (%p81) target = $region20
        $region19: #{tpu_custom_call.1} parent=15 // pred_region
          %s84 = sand.u32 %s20, 1
          %s85 = scalar_lea.sflag [#allocation3], %s84
          %s86 = sand.u32 %s20, 1
          %s87 = smul.addr %s86, 32
          %s88 = scalar_lea.vmem [#allocation2], %s87
          %s89 = smul.u32 2, %s10
          %s91 = ssub.s32 512, 512
          %92 = vsyncadd %s85, %s91
          %s93 = smul.addr %s89, 2
          %s94 = smul.addr %s93, 128
          %s95 = scalar_lea.hbm %s0, %s94
          %s96 = sshll.u32 %s88, 4
          %s97 = int_to_ptr.vmem [resolvable:$true] %s96
          %102 = dma.hbm_to_vmem [thread:$0]  %s95, 512, %s97, %s85, 128, 128, 8
        $region20: #{tpu_custom_call.1} parent=15 // pred_fallthru
          _
      $region16: #{tpu_custom_call.1} parent=5 // pred_fallthru
        _
      %p103 = scmp.le.s32.totalorder 1, %s10
      %p104 = scmp.lt.s32.totalorder %s10, 5
      %p105 = pnand %p103, %p104
      %p106 = pneg %p105
      // Predicated region
      $region21: #{tpu_custom_call.1} parent=5 // pred_check
        _
      $region22: #{tpu_custom_call.1} parent=5 // pred_check_branch
        %108 = sbr.rel (%p105) target = $region24
      $region23: #{tpu_custom_call.1} parent=5 // pred_region
        %s109 = ssub.s32 %s10, 1
        %s110 = sand.u32 %s23, 1
        %s111 = scalar_lea.sflag [#allocation3], %s110
        %s112 = sand.u32 %s23, 1
        %s113 = smul.addr %s112, 32
        %s114 = scalar_lea.vmem [#allocation2], %s113
        // Predicated region
        $region25: #{tpu_custom_call.1} parent=23 // pred_check
          %p115 = pneg %p36
        $region26: #{tpu_custom_call.1} parent=23 // pred_check_branch
          %117 = sbr.rel (%p115) target = $region28
        $region27: #{tpu_custom_call.1} parent=23 // pred_region
          %118 = dma.done %s111, 512
        $region28: #{tpu_custom_call.1} parent=23 // pred_fallthru
          _
        %s119 = sand.u32 %s23, 1
        %s120 = scalar_lea.sflag [#allocation3], %s119
        %s121 = sand.u32 %s23, 1
        %s122 = smul.addr %s121, 32
        %s123 = scalar_lea.vmem [#allocation2], %s122
        %p124 = pneg %p36
        %p125 = pneg %p33
        %p126 = pneg %p62
        %p127 = pneg %p59
        %s128 = smul.u32 2, %s15
        %p129 = scmp.lt.s32.totalorder %s128, 7
        %s130 = scalar_select %p129, %s128, 7
        %s131 = smul.addr %s130, 2
        %s132 = smul.addr %s131, 8
        %s133 = scalar_lea.vmem %s1, %s132
        %s134 = smul.u32 2, %s15
        %s135 = smul.u32 2, %s15
        %p136 = scmp.lt.s32.totalorder %s135, 7
        %s137 = scalar_select %p136, %s135, 7
        %s138 = smul.addr %s137, 2
        %s139 = smul.addr %s138, 8
        %s140 = scalar_lea.vmem %s1, %s139
        %s141 = smul.u32 2, %s15
        %v142 = vld [vmem:[%s114] sm:$0xff]
        %v143 = vld [vmem:[%s114 + $0x8] sm:$0xff]
        %v144 = vld [vmem:[%s114 + $0x10] sm:$0xff]
        %v145 = vld [vmem:[%s114 + $0x18] sm:$0xff]
        %150 = vrot.lane.b32.xlu0 %v142, 2
        %v151 = vpop.permute.xlu0 %150
        %152 = vrot.lane.b32.xlu0 %v143, 2
        %v153 = vpop.permute.xlu0 %152
        %154 = vrot.lane.b32.xlu0 %v144, 2
        %v155 = vpop.permute.xlu0 %154
        %156 = vrot.lane.b32.xlu0 %v145, 2
        %v157 = vpop.permute.xlu0 %156
        %v162 = vsub.f32 %v142, %v151
        %v163 = vsub.f32 %v143, %v153
        %v164 = vsub.f32 %v144, %v155
        %v165 = vsub.f32 %v145, %v157
        %vm166 = vcmask 1041408
        %v167 = vrot.slane %v142, 6
        %v168 = vrot.slane %v143, 6
        %v169 = vsel %vm166, %v167, %v168
        %v170 = vrot.slane %v144, 6
        %v171 = vrot.slane %v145, 6
        %v172 = vsel %vm166, %v170, %v171
        %v177 = vsub.f32 %v142, %v167
        %v178 = vsub.f32 %v143, %v169
        %v179 = vsub.f32 %v144, %v170
        %v180 = vsub.f32 %v145, %v172
        %v181 = vmul.f32 %v162, %v162
        %v182 = vmul.f32 %v163, %v163
        %v183 = vmul.f32 %v164, %v164
        %v184 = vmul.f32 %v165, %v165
        %v185 = vmul.f32 %v177, %v177
        %v186 = vmul.f32 %v178, %v178
        %v187 = vmul.f32 %v179, %v179
        %v188 = vmul.f32 %v180, %v180
        %vm193 = vcmask 1046528
        %v194 = vrot.slane %v185, 1
        %v195 = vrot.slane %v186, 1
        %v196 = vsel %vm193, %v194, %v195
        %v197 = vrot.slane %v187, 1
        %v198 = vrot.slane %v188, 1
        %v199 = vsel %vm193, %v197, %v198
        %200 = vrot.lane.b32.xlu0 %v196, 1
        %v201 = vpop.permute.xlu0 %200
        %202 = vrot.lane.b32.xlu0 %v195, 1
        %v203 = vpop.permute.xlu0 %202
        %204 = vrot.lane.b32.xlu0 %v199, 1
        %v205 = vpop.permute.xlu0 %204
        %206 = vrot.lane.b32.xlu0 %v198, 1
        %v207 = vpop.permute.xlu0 %206
        %v212 = vadd.f32 %v181, %v201
        %v213 = vadd.f32 %v182, %v203
        %v214 = vadd.f32 %v183, %v205
        %v215 = vadd.f32 %v184, %v207
        %v216 = vrsqrt.pop %v212
        %v217 = vmul.f32 %v212, %v216
        %vm218 = vcmp.eq.f32.partialorder %v212, inf
        %v219 = vsel %vm218, %v212, %v217
        %vm220 = vcmp.eq.f32.partialorder %v212, 0.0
        %v221 = vand.u32 %v212, 2147483648
        %v222 = vsel %vm220, %v221, %v219
        %v223 = vrsqrt.pop %v213
        %v224 = vmul.f32 %v213, %v223
        %vm225 = vcmp.eq.f32.partialorder %v213, inf
        %v226 = vsel %vm225, %v213, %v224
        %vm227 = vcmp.eq.f32.partialorder %v213, 0.0
        %v228 = vand.u32 %v213, 2147483648
        %v229 = vsel %vm227, %v228, %v226
        %v230 = vrsqrt.pop %v214
        %v231 = vmul.f32 %v214, %v230
        %vm232 = vcmp.eq.f32.partialorder %v214, inf
        %v233 = vsel %vm232, %v214, %v231
        %vm234 = vcmp.eq.f32.partialorder %v214, 0.0
        %v235 = vand.u32 %v214, 2147483648
        %v236 = vsel %vm234, %v235, %v233
        %v237 = vrsqrt.pop %v215
        %v238 = vmul.f32 %v215, %v237
        %vm239 = vcmp.eq.f32.partialorder %v215, inf
        %v240 = vsel %vm239, %v215, %v238
        %vm241 = vcmp.eq.f32.partialorder %v215, 0.0
        %v242 = vand.u32 %v215, 2147483648
        %v243 = vsel %vm241, %v242, %v240
        %v244 = vmul.f32 %v222, 0.5
        %v245 = vmul.f32 %v229, 0.5
        %v246 = vmul.f32 %v236, 0.5
        %v247 = vmul.f32 %v243, 0.5
        %252 = vrot.lane.b32.xlu0 %v244, 126
        %v253 = vpop.permute.xlu0 %252
        %254 = vrot.lane.b32.xlu0 %v245, 126
        %v255 = vpop.permute.xlu0 %254
        %256 = vrot.lane.b32.xlu0 %v246, 126
        %v257 = vpop.permute.xlu0 %256
        %258 = vrot.lane.b32.xlu0 %v247, 126
        %v259 = vpop.permute.xlu0 %258
        %vm264 = vcmask 113665
        %265 = vst.msk [vmem:[%s140 - $0x1] sm:$0xfe] %vm264, %v253
        %vm266 = vcmask 112640
        %267 = vst.msk [vmem:[%s140 + $0x7] sm:$0x7f] %vm266, %v255
        %268 = vst.msk [vmem:[%s140 + $0xf] sm:$0xfe] %vm264, %v257
        %269 = vst.msk [vmem:[%s140 + $0x17] sm:$0x7f] %vm266, %v259
        %s270 = smul.u32 2, %s15
        %p271 = scmp.lt.s32.totalorder %s270, 7
        %s272 = scalar_select %p271, %s270, 7
        %s273 = smul.addr %s272, 2
        %s274 = smul.addr %s273, 8
        %s275 = scalar_lea.vmem %s1, %s274
        // Predicated region
        $region29: #{tpu_custom_call.1} parent=23 // pred_check
          %p276 = pneg %p59
        $region30: #{tpu_custom_call.1} parent=23 // pred_check_branch
          %278 = sbr.rel (%p276) target = $region32
        $region31: #{tpu_custom_call.1} parent=23 // pred_region
          %s279 = smul.u32 2, %s15
        $region32: #{tpu_custom_call.1} parent=23 // pred_fallthru
          _
      $region24: #{tpu_custom_call.1} parent=5 // pred_fallthru
        _
      %p280 = scmp.le.s32.totalorder 2, %s10
      // Predicated region
      $region33: #{tpu_custom_call.1} parent=5 // pred_check
        %p281 = pneg %p280
      $region34: #{tpu_custom_call.1} parent=5 // pred_check_branch
        %283 = sbr.rel (%p281) target = $region36
      $region35: #{tpu_custom_call.1} parent=5 // pred_region
        %s284 = ssub.s32 %s10, 2
        // Predicated region
        $region37: #{tpu_custom_call.1} parent=35 // pred_check
          %p285 = pneg %p65
        $region38: #{tpu_custom_call.1} parent=35 // pred_check_branch
          %287 = sbr.rel (%p285) target = $region40
        $region39: #{tpu_custom_call.1} parent=35 // pred_region
          %s288 = smul.u32 2, %s16
          %p289 = scmp.lt.s32.totalorder %s288, 7
          %s290 = scalar_select %p289, %s288, 7
          %s291 = smul.addr %s290, 2
          %s292 = smul.addr %s291, 8
          %s293 = scalar_lea.vmem %s1, %s292
        $region40: #{tpu_custom_call.1} parent=35 // pred_fallthru
          _
      $region36: #{tpu_custom_call.1} parent=5 // pred_fallthru
        _
    $region6: #{tpu_custom_call.1} parent=1 // loop_footer
      %s14 = sadd.s32 1, %s10
    $region7: #{tpu_custom_call.1} parent=1 // loop_footer_branch
      %9 = sbr.rel target = $region3
    $region8: #{tpu_custom_call.1} parent=1 // loop_exit
      _
    %294 = vsyncpa [#allocation3], 1
    %s295 = scalar_lea.sflag [#allocation3], 1
    %296 = vsyncpa %s295, 1

</llo_original>
